<compile_context>
chip_gen: v6e
topology: v6e:2x2x1
jax: 0.10.0
libtpu: 0.0.40
codegen_flags: <defaults>
</compile_context>

<pallas_src>
import numpy as np
import jax
import jax.numpy as jnp
from jax import lax
from jax.experimental import pallas as pl
from jax.experimental.pallas import tpu as pltpu


def q_mlp_kernel(s_ref, a_ref, w0s_ref, w0a_ref, b0_ref, w1_ref, b1_ref,
                 w2t_ref, b2t_ref, out_ref):
    # layer 0: split linear (state / action) + bias + ReLU  (MXU, f32 acc)
    h = jnp.dot(s_ref[...], w0s_ref[...], preferred_element_type=jnp.float32)
    h = h + jnp.dot(a_ref[...], w0a_ref[...], preferred_element_type=jnp.float32)
    h = jnp.maximum(h + b0_ref[...], 0.0)
    # layer 1: linear + ReLU
    h = jnp.dot(h, w1_ref[...], preferred_element_type=jnp.float32)
    h = jnp.maximum(h + b1_ref[...], 0.0)
    # final layer, computed transposed so the store is lane-dense:
    #   q_t[o, b] = sum_k w2t[o, k] * h[b, k]      (N-T matmul on the MXU)
    q_t = lax.dot_general(w2t_ref[...], h, (((1,), (1,)), ((), ())),
                          preferred_element_type=jnp.float32)
    out_ref[...] = (q_t + b2t_ref[...]).astype(out_ref.dtype)


def _round_up(x, m):
    return ((x + m - 1) // m) * m


def _prepare_params(params, state_dim, lane=128):
    """Lane-pad hidden dims to 128 and lay weights out for the kernel.

    Zero padding is exact: padded hidden units get zero weight + zero bias,
    so they output relu(0) = 0 and the next layer's padded rows are zero.
    """
    w0, b0, w1, b1, w2, b2 = params
    h0 = w0.shape[1]
    h1 = w1.shape[1]
    hp0 = _round_up(h0, lane)
    hp1 = _round_up(h1, lane)

    w0p = jnp.pad(w0, ((0, 0), (0, hp0 - h0)))          # [in, hp0]
    w0s = w0p[:state_dim]                                # [state_dim, hp0]
    w0a = w0p[state_dim:]                                # [action_dim, hp0]
    b0p = jnp.pad(b0, ((0, 0), (0, hp0 - h0)))           # [1, hp0]
    w1p = jnp.pad(w1, ((0, hp0 - h0), (0, hp1 - h1)))    # [hp0, hp1]
    b1p = jnp.pad(b1, ((0, 0), (0, hp1 - h1)))           # [1, hp1]
    w2t = jnp.pad(w2.T, ((0, 0), (0, hp1 - h1)))         # [out, hp1]
    b2t = b2.T                                           # [out, 1]
    return w0s, w0a, b0p, w1p, b1p, w2t, b2t


def q_forward(state, action, params, *, tile_b=512):
    """Pallas-backed forward pass of the Q module. Returns [batch, out_size]."""
    batch, state_dim = state.shape
    action_dim = action.shape[1]
    out_size = params[4].shape[1]

    w0s, w0a, b0, w1, b1, w2t, b2t = _prepare_params(params, state_dim)

    # Batch tile: large enough to amortize per-step overhead; full-extent for
    # small batches (keeps the (8,128) divisibility rule satisfied since a
    # block equal to the full array dim is always legal).
    tile_b = min(tile_b, batch)
    if batch > 8:
        tile_b = max(8, (tile_b // 8) * 8)   # keep sublane-aligned tiles
    grid = (pl.cdiv(batch, tile_b),)

    # Advisory cost for XLA's scheduler.
    weight_bytes = sum(int(np.prod(p.shape)) for p in
                       (w0s, w0a, b0, w1, b1, w2t, b2t)) * 4
    flops = 2 * batch * (w0s.shape[0] * w0s.shape[1]
                         + w0a.shape[0] * w0a.shape[1]
                         + w1.shape[0] * w1.shape[1]
                         + w2t.shape[1] * w2t.shape[0])
    bytes_accessed = 4 * batch * (state_dim + action_dim + out_size) + weight_bytes

    resident = lambda arr: pl.BlockSpec(arr.shape, lambda i: (0, 0))

    q_t = pl.pallas_call(
        q_mlp_kernel,
        out_shape=jax.ShapeDtypeStruct((out_size, batch), jnp.float32),
        grid=grid,
        in_specs=[
            pl.BlockSpec((tile_b, state_dim), lambda i: (i, 0)),
            pl.BlockSpec((tile_b, action_dim), lambda i: (i, 0)),
            resident(w0s), resident(w0a), resident(b0),
            resident(w1), resident(b1),
            resident(w2t), resident(b2t),
        ],
        out_specs=pl.BlockSpec((out_size, tile_b), lambda i: (0, i)),
        compiler_params=pltpu.CompilerParams(
            dimension_semantics=("parallel",)),
        cost_estimate=pl.CostEstimate(flops=flops, transcendentals=0,
                                      bytes_accessed=bytes_accessed),
    )(state, action, w0s, w0a, b0, w1, b1, w2t, b2t)

    # (out_size, batch) -> (batch, out_size); cheap wrapper-side layout glue.
    return q_t.T


def init_q_params(key, state_dim, action_dim, out_size, hidden_sizes=(256, 256)):
    """Deterministic parameter init mirroring Q.reset_parameters().

    PyTorch fanin_init uses bound = 1/sqrt(weight.size(0)) where weight is
    [out, in] (rlkit quirk: that's out_features); hidden biases are 0.1; the
    last layer's weight/bias are uniform(-0.003, 0.003).
    Weights here are stored transposed: [in, out].
    """
    params = []
    in_size = state_dim + action_dim
    for h in hidden_sizes:
        key, kw = jax.random.split(key)
        bound = 1.0 / np.sqrt(h)  # fan_in = weight.size(0) = out_features in the PyTorch code
        w = jax.random.uniform(kw, (in_size, h), jnp.float32, -bound, bound)
        b = jnp.full((1, h), 0.1, jnp.float32)
        params += [w, b]
        in_size = h
    key, kw, kb = jax.random.split(key, 3)
    init_w1 = 0.003
    w_last = jax.random.uniform(kw, (in_size, out_size), jnp.float32, -init_w1, init_w1)
    b_last = jax.random.uniform(kb, (1, out_size), jnp.float32, -init_w1, init_w1)
    params += [w_last, b_last]
    return tuple(params)


def q_reference(state, action, params):
    """Pure-JAX reference for correctness checking."""
    w0, b0, w1, b1, w2, b2 = params
    sa = jnp.concatenate([state, action], axis=-1)
    h = jnp.maximum(sa @ w0 + b0, 0.0)
    h = jnp.maximum(h @ w1 + b1, 0.0)
    return h @ w2 + b2


if __name__ == "__main__":
    key = jax.random.PRNGKey(0)
    state_dim, action_dim, out_size = 12, 4, 1
    hidden_sizes = (256, 256)   # module default; already lane-dense (no padding)

    k_s, k_a, k_p = jax.random.split(key, 3)
    params = init_q_params(k_p, state_dim, action_dim, out_size, hidden_sizes)

    # Tiled path: batch 256 split into two 128-row tiles over a parallel grid.
    batch = 256
    state = jax.random.normal(k_s, (batch, state_dim), jnp.float32)
    action = jax.random.normal(k_a, (batch, action_dim), jnp.float32)
    q = q_forward(state, action, params, tile_b=128)
    jax.block_until_ready(q)
    np.testing.assert_allclose(np.asarray(q),
                               np.asarray(q_reference(state, action, params)),
                               rtol=1e-5, atol=1e-5)

    # Small-batch path: single full-extent tile (e.g. online RL inference).
    q_small = q_forward(state[:8], action[:8], params)
    jax.block_until_ready(q_small)
    np.testing.assert_allclose(np.asarray(q_small),
                               np.asarray(q_reference(state[:8], action[:8], params)),
                               rtol=1e-5, atol=1e-5)

    print("KERNEL_OK")
</pallas_src>

<mosaic_0001>
module attributes {stable_mosaic.version = 11 : i64} {
  func.func @q_mlp_kernel(%arg0: i32, %arg1: memref<128x12xf32, #tpu.memory_space<vmem>>, %arg2: memref<128x4xf32, #tpu.memory_space<vmem>>, %arg3: memref<12x256xf32, #tpu.memory_space<vmem>>, %arg4: memref<4x256xf32, #tpu.memory_space<vmem>>, %arg5: memref<1x256xf32, #tpu.memory_space<vmem>>, %arg6: memref<256x256xf32, #tpu.memory_space<vmem>>, %arg7: memref<1x256xf32, #tpu.memory_space<vmem>>, %arg8: memref<1x256xf32, #tpu.memory_space<vmem>>, %arg9: memref<1x1xf32, #tpu.memory_space<vmem>>, %arg10: memref<1x128xf32, #tpu.memory_space<vmem>>) attributes {dimension_semantics = [#tpu.dimension_semantics<parallel>], iteration_bounds = array<i64: 2>, scalar_prefetch = 0 : i64, scratch_operands = 0 : i64, tpu.core_type = #tpu.core_type<tc>, window_params = [{transform_indices = @transform_0, window_bounds = array<i64: 128, 12>}, {transform_indices = @transform_1, window_bounds = array<i64: 128, 4>}, {pipeline_mode = #tpu.pipeline_mode<synchronous>, transform_indices = @transform_2, window_bounds = array<i64: 12, 256>}, {pipeline_mode = #tpu.pipeline_mode<synchronous>, transform_indices = @transform_3, window_bounds = array<i64: 4, 256>}, {pipeline_mode = #tpu.pipeline_mode<synchronous>, transform_indices = @transform_4, window_bounds = array<i64: 1, 256>}, {pipeline_mode = #tpu.pipeline_mode<synchronous>, transform_indices = @transform_5, window_bounds = array<i64: 256, 256>}, {pipeline_mode = #tpu.pipeline_mode<synchronous>, transform_indices = @transform_6, window_bounds = array<i64: 1, 256>}, {pipeline_mode = #tpu.pipeline_mode<synchronous>, transform_indices = @transform_7, window_bounds = array<i64: 1, 256>}, {pipeline_mode = #tpu.pipeline_mode<synchronous>, transform_indices = @transform_8, window_bounds = array<i64: 1, 1>}, {transform_indices = @transform_9, window_bounds = array<i64: 1, 128>}]} {
    %c0 = arith.constant 0 : index
    %c0_0 = arith.constant 0 : index
    %0 = vector.load %arg1[%c0, %c0_0] : memref<128x12xf32, #tpu.memory_space<vmem>>, vector<128x12xf32>
    %c0_1 = arith.constant 0 : index
    %c0_2 = arith.constant 0 : index
    %1 = vector.load %arg3[%c0_1, %c0_2] : memref<12x256xf32, #tpu.memory_space<vmem>>, vector<12x256xf32>
    %cst = arith.constant dense<0.000000e+00> : vector<128x256xf32>
    %2 = tpu.matmul %0, %1, %cst {dimension_numbers = #tpu.dot_dimension_numbers<[1], [0], [0], [1], [0, 0, 1, 1], [], []>} : vector<128x12xf32>, vector<12x256xf32>, vector<128x256xf32> -> vector<128x256xf32>
    %c0_3 = arith.constant 0 : index
    %c0_4 = arith.constant 0 : index
    %3 = vector.load %arg2[%c0_3, %c0_4] : memref<128x4xf32, #tpu.memory_space<vmem>>, vector<128x4xf32>
    %c0_5 = arith.constant 0 : index
    %c0_6 = arith.constant 0 : index
    %4 = vector.load %arg4[%c0_5, %c0_6] : memref<4x256xf32, #tpu.memory_space<vmem>>, vector<4x256xf32>
    %cst_7 = arith.constant dense<0.000000e+00> : vector<128x256xf32>
    %5 = tpu.matmul %3, %4, %cst_7 {dimension_numbers = #tpu.dot_dimension_numbers<[1], [0], [0], [1], [0, 0, 1, 1], [], []>} : vector<128x4xf32>, vector<4x256xf32>, vector<128x256xf32> -> vector<128x256xf32>
    %6 = arith.addf %2, %5 : vector<128x256xf32>
    %c0_8 = arith.constant 0 : index
    %c0_9 = arith.constant 0 : index
    %7 = vector.load %arg5[%c0_8, %c0_9] : memref<1x256xf32, #tpu.memory_space<vmem>>, vector<1x256xf32>
    %8 = vector.broadcast %7 : vector<1x256xf32> to vector<128x256xf32>
    %9 = arith.addf %6, %8 : vector<128x256xf32>
    %cst_10 = arith.constant 0.000000e+00 : f32
    %10 = vector.broadcast %cst_10 : f32 to vector<128x256xf32>
    %11 = arith.maximumf %9, %10 : vector<128x256xf32>
    %c0_11 = arith.constant 0 : index
    %c0_12 = arith.constant 0 : index
    %12 = vector.load %arg6[%c0_11, %c0_12] : memref<256x256xf32, #tpu.memory_space<vmem>>, vector<256x256xf32>
    %cst_13 = arith.constant dense<0.000000e+00> : vector<128x256xf32>
    %13 = tpu.matmul %11, %12, %cst_13 {dimension_numbers = #tpu.dot_dimension_numbers<[1], [0], [0], [1], [0, 0, 1, 1], [], []>} : vector<128x256xf32>, vector<256x256xf32>, vector<128x256xf32> -> vector<128x256xf32>
    %c0_14 = arith.constant 0 : index
    %c0_15 = arith.constant 0 : index
    %14 = vector.load %arg7[%c0_14, %c0_15] : memref<1x256xf32, #tpu.memory_space<vmem>>, vector<1x256xf32>
    %15 = vector.broadcast %14 : vector<1x256xf32> to vector<128x256xf32>
    %16 = arith.addf %13, %15 : vector<128x256xf32>
    %cst_16 = arith.constant 0.000000e+00 : f32
    %17 = vector.broadcast %cst_16 : f32 to vector<128x256xf32>
    %18 = arith.maximumf %16, %17 : vector<128x256xf32>
    %c0_17 = arith.constant 0 : index
    %c0_18 = arith.constant 0 : index
    %19 = vector.load %arg8[%c0_17, %c0_18] : memref<1x256xf32, #tpu.memory_space<vmem>>, vector<1x256xf32>
    %cst_19 = arith.constant dense<0.000000e+00> : vector<1x128xf32>
    %20 = tpu.matmul %19, %18, %cst_19 {dimension_numbers = #tpu.dot_dimension_numbers<[1], [1], [0], [0], [0, 0, 1, 0], [], []>} : vector<1x256xf32>, vector<128x256xf32>, vector<1x128xf32> -> vector<1x128xf32>
    %c0_20 = arith.constant 0 : index
    %c0_21 = arith.constant 0 : index
    %21 = vector.load %arg9[%c0_20, %c0_21] : memref<1x1xf32, #tpu.memory_space<vmem>>, vector<1x1xf32>
    %22 = vector.broadcast %21 : vector<1x1xf32> to vector<1x128xf32>
    %23 = arith.addf %20, %22 : vector<1x128xf32>
    %c0_22 = arith.constant 0 : index
    %c0_23 = arith.constant 0 : index
    %24 = vector.load %arg10[%c0_22, %c0_23] : memref<1x128xf32, #tpu.memory_space<vmem>>, vector<1x128xf32>
    tpu.vector_store %arg10[%c0_22, %c0_23], %23 {strides = array<i32>} : memref<1x128xf32, #tpu.memory_space<vmem>>, vector<1x128xf32>,
    return
  }
  func.func @transform_0(%arg0: i32) -> (i32, i32) {
    %c0_i32 = arith.constant 0 : i32
    %c0_i32_0 = arith.constant 0 : i32
    return %arg0, %c0_i32 : i32, i32
  }
  func.func @transform_1(%arg0: i32) -> (i32, i32) {
    %c0_i32 = arith.constant 0 : i32
    %c0_i32_0 = arith.constant 0 : i32
    return %arg0, %c0_i32 : i32, i32
  }
  func.func @transform_2(%arg0: i32) -> (i32, i32) {
    %c0_i32 = arith.constant 0 : i32
    %c0_i32_0 = arith.constant 0 : i32
    %c0_i32_1 = arith.constant 0 : i32
    return %c0_i32, %c0_i32_0 : i32, i32
  }
  func.func @transform_3(%arg0: i32) -> (i32, i32) {
    %c0_i32 = arith.constant 0 : i32
    %c0_i32_0 = arith.constant 0 : i32
    %c0_i32_1 = arith.constant 0 : i32
    return %c0_i32, %c0_i32_0 : i32, i32
  }
  func.func @transform_4(%arg0: i32) -> (i32, i32) {
    %c0_i32 = arith.constant 0 : i32
    %c0_i32_0 = arith.constant 0 : i32
    %c0_i32_1 = arith.constant 0 : i32
    return %c0_i32, %c0_i32_0 : i32, i32
  }
  func.func @transform_5(%arg0: i32) -> (i32, i32) {
    %c0_i32 = arith.constant 0 : i32
    %c0_i32_0 = arith.constant 0 : i32
    %c0_i32_1 = arith.constant 0 : i32
    return %c0_i32, %c0_i32_0 : i32, i32
  }
  func.func @transform_6(%arg0: i32) -> (i32, i32) {
    %c0_i32 = arith.constant 0 : i32
    %c0_i32_0 = arith.constant 0 : i32
    %c0_i32_1 = arith.constant 0 : i32
    return %c0_i32, %c0_i32_0 : i32, i32
  }
  func.func @transform_7(%arg0: i32) -> (i32, i32) {
    %c0_i32 = arith.constant 0 : i32
    %c0_i32_0 = arith.constant 0 : i32
    %c0_i32_1 = arith.constant 0 : i32
    return %c0_i32, %c0_i32_0 : i32, i32
  }
  func.func @transform_8(%arg0: i32) -> (i32, i32) {
    %c0_i32 = arith.constant 0 : i32
    %c0_i32_0 = arith.constant 0 : i32
    %c0_i32_1 = arith.constant 0 : i32
    return %c0_i32, %c0_i32_0 : i32, i32
  }
  func.func @transform_9(%arg0: i32) -> (i32, i32) {
    %c0_i32 = arith.constant 0 : i32
    %c0_i32_0 = arith.constant 0 : i32
    return %c0_i32, %arg0 : i32, i32
  }
}

</mosaic_0001>

<llo_original>
// kernel: tpu_custom_call.1
$region0: #{tpu_custom_call.1}
  #allocation0 [shape = 'u32[]', space=smem, size = 0x4, offset = 0x4, fixed_abs, tag = 'smem constant byte address 0x4 - core index']
  #allocation1 [shape = 'u32[144,128]{1,0:T(1,128)}', space=vmem, size = 0x12000, scoped, tag = 'internal scratch']
  #allocation2 [shape = 'f32[1,1]{1,0:T(1,128)S(1)}', space=vmem, size = 0x200, scoped, tag = 'scoped memory for tpu_custom_call.1']
  %s0 = inlined_call_operand.vmem [shape: f32[256,12], index: 0, kind: input, shape index: {}]
  %s1 = inlined_call_operand.vmem [shape: f32[256,4], index: 1, kind: input, shape index: {}]
  %s2 = inlined_call_operand.vmem [shape: f32[12,256], index: 2, kind: input, shape index: {}]
  %s3 = inlined_call_operand.vmem [shape: f32[4,256], index: 3, kind: input, shape index: {}]
  %s4 = inlined_call_operand.vmem [shape: f32[1,256], index: 4, kind: input, shape index: {}]
  %s5 = inlined_call_operand.vmem [shape: f32[256,256], index: 5, kind: input, shape index: {}]
  %s6 = inlined_call_operand.vmem [shape: f32[1,256], index: 6, kind: input, shape index: {}]
  %s7 = inlined_call_operand.vmem [shape: f32[1,256], index: 7, kind: input, shape index: {}]
  %s8 = inlined_call_operand.<no memory space> [shape: f32[1,1], index: 8, kind: input, shape index: {}]
  %s9 = inlined_call_operand.hbm [shape: f32[1,256], index: 9, kind: output, shape index: {}]
  %s10 = sld [smem:[#allocation0]]
  $region69: #{tpu_custom_call.1} parent=0
    _
  %s12 = ssub.s32 1, %s10
  %s13 = scalar_select 0, %s12, %s10
  %v14 = vstv %s8
  %15 = vst [vmem:[#allocation2] sm:$0x1] %v14
  $region1: #{tpu_custom_call.1} parent=0
    #allocation3 [shape = 'u8[1024]{0}', space=vmem, size = 0x400, scoped, tag = 'output window, operand 0']
    #allocation4 [shape = 's32[2]{0}', space=sflag, size = 0x8, scoped, tag = 'scoped memory for tpu_custom_call.1']
    %16 = vsyncpa [#allocation4], 0
    %s17 = scalar_lea.sflag [#allocation4], 1
    %18 = vsyncpa %s17, 0
    loop: start=0, step=1, limit=4
    $region2: #{tpu_custom_call.1} parent=1 // loop_pre_header
      _
    $region3: #{tpu_custom_call.1} parent=1 // loop_header
      %s20 = sphi 0, %s24
      %p21 = scmp.ge.s32.totalorder %s20, 4
      %s30 = sphi 0, %s32
      %s33 = sphi 0, %s30
      %s34 = sphi 0, %s33
      %s50 = sphi 0, %s34
      %s56 = sphi 0, %s58
      %s59 = sphi 0, %s56
      %s60 = sphi 0, %s59
      %s76 = sphi 0, %s60
      %s80 = sphi 0, %s80
      %s82 = sphi 0, %s80
      %s83 = sphi 0, %s82
      %s97 = sphi 0, %s83
      %s101 = sphi 0, %s101
      %s103 = sphi 0, %s101
      %s104 = sphi 0, %s103
      %s118 = sphi 0, %s104
      %s122 = sphi 0, %s122
      %s124 = sphi 0, %s122
      %s125 = sphi 0, %s124
      %s139 = sphi 0, %s125
      %s143 = sphi 0, %s143
      %s145 = sphi 0, %s143
      %s146 = sphi 0, %s145
      %s160 = sphi 0, %s146
      %s164 = sphi 0, %s164
      %s166 = sphi 0, %s164
      %s167 = sphi 0, %s166
      %s181 = sphi 0, %s167
      %s185 = sphi 0, %s185
      %s187 = sphi 0, %s185
      %s188 = sphi 0, %s187
      %s202 = sphi 0, %s188
      %s206 = sphi 0, %s206
      %s208 = sphi 0, %s206
      %s209 = sphi 0, %s208
      %s223 = sphi 0, %s209
      %s229 = sphi 0, %s231
      %s232 = sphi 0, %s229
      %s233 = sphi 0, %s232
      %s249 = sphi 0, %s233
    $region4: #{tpu_custom_call.1} parent=1 // loop_header_branch
      %23 = sbr.rel (%p21) target = $region8
    $region5: #{tpu_custom_call.1} parent=1 // loop_body
      %s25 = ssub.s32 %s20, 1
      %s26 = ssub.s32 %s20, 2
      %s27 = sadd.s32 %s20, 1
      %s28 = ssub.s32 %s20, %s27
      %p29 = scmp.eq.s32.totalorder %s28, 0
      %s31 = sadd.s32 %s30, 1
      %s32 = scalar_select %p29, %s30, %s31
      %p35 = pneg %p29
      %p36 = scmp.eq.s32.totalorder %s20, 1
      %p37 = por %p35, %p36
      %p38 = scmp.ne.s32.totalorder %s30, %s33
      %p39 = scmp.eq.s32.totalorder %s20, 0
      %p40 = por %p38, %p39
      %p41 = scmp.ne.s32.totalorder %s30, %s33
      %p42 = scmp.eq.s32.totalorder %s25, 1
      %p43 = por %p41, %p42
      %p44 = scmp.ne.s32.totalorder %s33, %s34
      %p45 = scmp.eq.s32.totalorder %s25, 0
      %p46 = por %p44, %p45
      %p47 = scmp.ne.s32.totalorder %s33, %s34
      %p48 = scmp.eq.s32.totalorder %s26, 1
      %p49 = por %p47, %p48
      %p51 = scmp.ne.s32.totalorder %s34, %s50
      %p52 = scmp.eq.s32.totalorder %s26, 0
      %p53 = por %p51, %p52
      %s54 = ssub.s32 %s20, %s27
      %p55 = scmp.eq.s32.totalorder %s54, 0
      %s57 = sadd.s32 %s56, 1
      %s58 = scalar_select %p55, %s56, %s57
      %p61 = pneg %p55
      %p62 = scmp.eq.s32.totalorder %s20, 1
      %p63 = por %p61, %p62
      %p64 = scmp.ne.s32.totalorder %s56, %s59
      %p65 = scmp.eq.s32.totalorder %s20, 0
      %p66 = por %p64, %p65
      %p67 = scmp.ne.s32.totalorder %s56, %s59
      %p68 = scmp.eq.s32.totalorder %s25, 1
      %p69 = por %p67, %p68
      %p70 = scmp.ne.s32.totalorder %s59, %s60
      %p71 = scmp.eq.s32.totalorder %s25, 0
      %p72 = por %p70, %p71
      %p73 = scmp.ne.s32.totalorder %s59, %s60
      %p74 = scmp.eq.s32.totalorder %s26, 1
      %p75 = por %p73, %p74
      %p77 = scmp.ne.s32.totalorder %s60, %s76
      %p78 = scmp.eq.s32.totalorder %s26, 0
      %p79 = por %p77, %p78
      %s81 = sadd.s32 %s80, 1
      %p84 = scmp.eq.s32.totalorder %s20, 1
      %p85 = scmp.ne.s32.totalorder %s80, %s82
      %p86 = scmp.eq.s32.totalorder %s20, 0
      %p87 = por %p85, %p86
      %p88 = scmp.ne.s32.totalorder %s80, %s82
      %p89 = scmp.eq.s32.totalorder %s25, 1
      %p90 = por %p88, %p89
      %p91 = scmp.ne.s32.totalorder %s82, %s83
      %p92 = scmp.eq.s32.totalorder %s25, 0
      %p93 = por %p91, %p92
      %p94 = scmp.ne.s32.totalorder %s82, %s83
      %p95 = scmp.eq.s32.totalorder %s26, 1
      %p96 = por %p94, %p95
      %p98 = scmp.ne.s32.totalorder %s83, %s97
      %p99 = scmp.eq.s32.totalorder %s26, 0
      %p100 = por %p98, %p99
      %s102 = sadd.s32 %s101, 1
      %p105 = scmp.eq.s32.totalorder %s20, 1
      %p106 = scmp.ne.s32.totalorder %s101, %s103
      %p107 = scmp.eq.s32.totalorder %s20, 0
      %p108 = por %p106, %p107
      %p109 = scmp.ne.s32.totalorder %s101, %s103
      %p110 = scmp.eq.s32.totalorder %s25, 1
      %p111 = por %p109, %p110
      %p112 = scmp.ne.s32.totalorder %s103, %s104
      %p113 = scmp.eq.s32.totalorder %s25, 0
      %p114 = por %p112, %p113
      %p115 = scmp.ne.s32.totalorder %s103, %s104
      %p116 = scmp.eq.s32.totalorder %s26, 1
      %p117 = por %p115, %p116
      %p119 = scmp.ne.s32.totalorder %s104, %s118
      %p120 = scmp.eq.s32.totalorder %s26, 0
      %p121 = por %p119, %p120
      %s123 = sadd.s32 %s122, 1
      %p126 = scmp.eq.s32.totalorder %s20, 1
      %p127 = scmp.ne.s32.totalorder %s122, %s124
      %p128 = scmp.eq.s32.totalorder %s20, 0
      %p129 = por %p127, %p128
      %p130 = scmp.ne.s32.totalorder %s122, %s124
      %p131 = scmp.eq.s32.totalorder %s25, 1
      %p132 = por %p130, %p131
      %p133 = scmp.ne.s32.totalorder %s124, %s125
      %p134 = scmp.eq.s32.totalorder %s25, 0
      %p135 = por %p133, %p134
      %p136 = scmp.ne.s32.totalorder %s124, %s125
      %p137 = scmp.eq.s32.totalorder %s26, 1
      %p138 = por %p136, %p137
      %p140 = scmp.ne.s32.totalorder %s125, %s139
      %p141 = scmp.eq.s32.totalorder %s26, 0
      %p142 = por %p140, %p141
      %s144 = sadd.s32 %s143, 1
      %p147 = scmp.eq.s32.totalorder %s20, 1
      %p148 = scmp.ne.s32.totalorder %s143, %s145
      %p149 = scmp.eq.s32.totalorder %s20, 0
      %p150 = por %p148, %p149
      %p151 = scmp.ne.s32.totalorder %s143, %s145
      %p152 = scmp.eq.s32.totalorder %s25, 1
      %p153 = por %p151, %p152
      %p154 = scmp.ne.s32.totalorder %s145, %s146
      %p155 = scmp.eq.s32.totalorder %s25, 0
      %p156 = por %p154, %p155
      %p157 = scmp.ne.s32.totalorder %s145, %s146
      %p158 = scmp.eq.s32.totalorder %s26, 1
      %p159 = por %p157, %p158
      %p161 = scmp.ne.s32.totalorder %s146, %s160
      %p162 = scmp.eq.s32.totalorder %s26, 0
      %p163 = por %p161, %p162
      %s165 = sadd.s32 %s164, 1
      %p168 = scmp.eq.s32.totalorder %s20, 1
      %p169 = scmp.ne.s32.totalorder %s164, %s166
      %p170 = scmp.eq.s32.totalorder %s20, 0
      %p171 = por %p169, %p170
      %p172 = scmp.ne.s32.totalorder %s164, %s166
      %p173 = scmp.eq.s32.totalorder %s25, 1
      %p174 = por %p172, %p173
      %p175 = scmp.ne.s32.totalorder %s166, %s167
      %p176 = scmp.eq.s32.totalorder %s25, 0
      %p177 = por %p175, %p176
      %p178 = scmp.ne.s32.totalorder %s166, %s167
      %p179 = scmp.eq.s32.totalorder %s26, 1
      %p180 = por %p178, %p179
      %p182 = scmp.ne.s32.totalorder %s167, %s181
      %p183 = scmp.eq.s32.totalorder %s26, 0
      %p184 = por %p182, %p183
      %s186 = sadd.s32 %s185, 1
      %p189 = scmp.eq.s32.totalorder %s20, 1
      %p190 = scmp.ne.s32.totalorder %s185, %s187
      %p191 = scmp.eq.s32.totalorder %s20, 0
      %p192 = por %p190, %p191
      %p193 = scmp.ne.s32.totalorder %s185, %s187
      %p194 = scmp.eq.s32.totalorder %s25, 1
      %p195 = por %p193, %p194
      %p196 = scmp.ne.s32.totalorder %s187, %s188
      %p197 = scmp.eq.s32.totalorder %s25, 0
      %p198 = por %p196, %p197
      %p199 = scmp.ne.s32.totalorder %s187, %s188
      %p200 = scmp.eq.s32.totalorder %s26, 1
      %p201 = por %p199, %p200
      %p203 = scmp.ne.s32.totalorder %s188, %s202
      %p204 = scmp.eq.s32.totalorder %s26, 0
      %p205 = por %p203, %p204
      %s207 = sadd.s32 %s206, 1
      %p210 = scmp.eq.s32.totalorder %s20, 1
      %p211 = scmp.ne.s32.totalorder %s206, %s208
      %p212 = scmp.eq.s32.totalorder %s20, 0
      %p213 = por %p211, %p212
      %p214 = scmp.ne.s32.totalorder %s206, %s208
      %p215 = scmp.eq.s32.totalorder %s25, 1
      %p216 = por %p214, %p215
      %p217 = scmp.ne.s32.totalorder %s208, %s209
      %p218 = scmp.eq.s32.totalorder %s25, 0
      %p219 = por %p217, %p218
      %p220 = scmp.ne.s32.totalorder %s208, %s209
      %p221 = scmp.eq.s32.totalorder %s26, 1
      %p222 = por %p220, %p221
      %p224 = scmp.ne.s32.totalorder %s209, %s223
      %p225 = scmp.eq.s32.totalorder %s26, 0
      %p226 = por %p224, %p225
      %s227 = ssub.s32 %s20, %s27
      %p228 = scmp.eq.s32.totalorder %s227, 0
      %s230 = sadd.s32 %s229, 1
      %s231 = scalar_select %p228, %s229, %s230
      %p234 = pneg %p228
      %p235 = scmp.eq.s32.totalorder %s20, 1
      %p236 = por %p234, %p235
      %p237 = scmp.ne.s32.totalorder %s229, %s232
      %p238 = scmp.eq.s32.totalorder %s20, 0
      %p239 = por %p237, %p238
      %p240 = scmp.ne.s32.totalorder %s229, %s232
      %p241 = scmp.eq.s32.totalorder %s25, 1
      %p242 = por %p240, %p241
      %p243 = scmp.ne.s32.totalorder %s232, %s233
      %p244 = scmp.eq.s32.totalorder %s25, 0
      %p245 = por %p243, %p244
      %p246 = scmp.ne.s32.totalorder %s232, %s233
      %p247 = scmp.eq.s32.totalorder %s26, 1
      %p248 = por %p246, %p247
      %p250 = scmp.ne.s32.totalorder %s233, %s249
      %p251 = scmp.eq.s32.totalorder %s26, 0
      %p252 = por %p250, %p251
      %p253 = scmp.le.s32.totalorder 1, %s20
      %p254 = scmp.lt.s32.totalorder %s20, 3
      %p255 = pnand %p253, %p254
      %p256 = pneg %p255
      // Predicated region
      $region9: #{tpu_custom_call.1} parent=5 // pred_check
        _
      $region10: #{tpu_custom_call.1} parent=5 // pred_check_branch
        %258 = sbr.rel (%p255) target = $region12
      $region11: #{tpu_custom_call.1} parent=5 // pred_region
        %s259 = ssub.s32 %s20, 1
        // Predicated region
        $region13: #{tpu_custom_call.1} parent=11 // pred_check
          %p260 = pneg %p93
        $region14: #{tpu_custom_call.1} parent=11 // pred_check_branch
          %262 = sbr.rel (%p260) target = $region16
        $region15: #{tpu_custom_call.1} parent=11 // pred_region
          _
        $region16: #{tpu_custom_call.1} parent=11 // pred_fallthru
          _
        // Predicated region
        $region17: #{tpu_custom_call.1} parent=11 // pred_check
          %p263 = pneg %p114
        $region18: #{tpu_custom_call.1} parent=11 // pred_check_branch
          %265 = sbr.rel (%p263) target = $region20
        $region19: #{tpu_custom_call.1} parent=11 // pred_region
          _
        $region20: #{tpu_custom_call.1} parent=11 // pred_fallthru
          _
        // Predicated region
        $region21: #{tpu_custom_call.1} parent=11 // pred_check
          %p266 = pneg %p135
        $region22: #{tpu_custom_call.1} parent=11 // pred_check_branch
          %268 = sbr.rel (%p266) target = $region24
        $region23: #{tpu_custom_call.1} parent=11 // pred_region
          _
        $region24: #{tpu_custom_call.1} parent=11 // pred_fallthru
          _
        // Predicated region
        $region25: #{tpu_custom_call.1} parent=11 // pred_check
          %p269 = pneg %p156
        $region26: #{tpu_custom_call.1} parent=11 // pred_check_branch
          %271 = sbr.rel (%p269) target = $region28
        $region27: #{tpu_custom_call.1} parent=11 // pred_region
          _
        $region28: #{tpu_custom_call.1} parent=11 // pred_fallthru
          _
        // Predicated region
        $region29: #{tpu_custom_call.1} parent=11 // pred_check
          %p272 = pneg %p177
        $region30: #{tpu_custom_call.1} parent=11 // pred_check_branch
          %274 = sbr.rel (%p272) target = $region32
        $region31: #{tpu_custom_call.1} parent=11 // pred_region
          _
        $region32: #{tpu_custom_call.1} parent=11 // pred_fallthru
          _
        // Predicated region
        $region33: #{tpu_custom_call.1} parent=11 // pred_check
          %p275 = pneg %p198
        $region34: #{tpu_custom_call.1} parent=11 // pred_check_branch
          %277 = sbr.rel (%p275) target = $region36
        $region35: #{tpu_custom_call.1} parent=11 // pred_region
          _
        $region36: #{tpu_custom_call.1} parent=11 // pred_fallthru
          _
        // Predicated region
        $region37: #{tpu_custom_call.1} parent=11 // pred_check
          %p278 = pneg %p219
        $region38: #{tpu_custom_call.1} parent=11 // pred_check_branch
          %280 = sbr.rel (%p278) target = $region40
        $region39: #{tpu_custom_call.1} parent=11 // pred_region
          _
        $region40: #{tpu_custom_call.1} parent=11 // pred_fallthru
          _
      $region12: #{tpu_custom_call.1} parent=5 // pred_fallthru
        _
      %p281 = scmp.lt.s32.totalorder %s20, 2
      // Predicated region
      $region41: #{tpu_custom_call.1} parent=5 // pred_check
        %p282 = pneg %p281
      $region42: #{tpu_custom_call.1} parent=5 // pred_check_branch
        %284 = sbr.rel (%p282) target = $region44
      $region43: #{tpu_custom_call.1} parent=5 // pred_region
        // Predicated region
        $region45: #{tpu_custom_call.1} parent=43 // pred_check
          %p285 = pneg %p40
        $region46: #{tpu_custom_call.1} parent=43 // pred_check_branch
          %287 = sbr.rel (%p285) target = $region48
        $region47: #{tpu_custom_call.1} parent=43 // pred_region
          %s288 = smul.u32 16, %s20
          %p289 = scmp.lt.s32.totalorder %s288, 31
          %s290 = scalar_select %p289, %s288, 31
          %s291 = smul.addr %s290, 8
          %s292 = scalar_lea.vmem %s0, %s291
          %s293 = smul.u32 16, %s20
        $region48: #{tpu_custom_call.1} parent=43 // pred_fallthru
          _
        // Predicated region
        $region49: #{tpu_custom_call.1} parent=43 // pred_check
          %p294 = pneg %p66
        $region50: #{tpu_custom_call.1} parent=43 // pred_check_branch
          %296 = sbr.rel (%p294) target = $region52
        $region51: #{tpu_custom_call.1} parent=43 // pred_region
          %s297 = smul.u32 16, %s20
          %p298 = scmp.lt.s32.totalorder %s297, 31
          %s299 = scalar_select %p298, %s297, 31
          %s300 = smul.addr %s299, 8
          %s301 = scalar_lea.vmem %s1, %s300
          %s302 = smul.u32 16, %s20
        $region52: #{tpu_custom_call.1} parent=43 // pred_fallthru
          _
      $region44: #{tpu_custom_call.1} parent=5 // pred_fallthru
        _
      %p303 = scmp.le.s32.totalorder 1, %s20
      %p304 = scmp.lt.s32.totalorder %s20, 3
      %p305 = pnand %p303, %p304
      %p306 = pneg %p305
      // Predicated region
      $region53: #{tpu_custom_call.1} parent=5 // pred_check
        _
      $region54: #{tpu_custom_call.1} parent=5 // pred_check_branch
        %308 = sbr.rel (%p305) target = $region56
      $region55: #{tpu_custom_call.1} parent=5 // pred_region
        %s309 = ssub.s32 %s20, 1
        %s310 = smul.u32 16, %s25
        %p311 = scmp.lt.s32.totalorder %s310, 31
        %s312 = scalar_select %p311, %s310, 31
        %s313 = smul.addr %s312, 8
        %s314 = scalar_lea.vmem %s0, %s313
        %p315 = pneg %p46
        %p316 = pneg %p43
        %s317 = smul.u32 16, %s25
        %p318 = scmp.lt.s32.totalorder %s317, 31
        %s319 = scalar_select %p318, %s317, 31
        %s320 = smul.addr %s319, 8
        %s321 = scalar_lea.vmem %s1, %s320
        %p322 = pneg %p72
        %p323 = pneg %p69
        %p324 = pneg %p93
        %p325 = pneg %p90
        %p326 = pneg %p114
        %p327 = pneg %p111
        %p328 = pneg %p135
        %p329 = pneg %p132
        %p330 = pneg %p156
        %p331 = pneg %p153
        %p332 = pneg %p177
        %p333 = pneg %p174
        %p334 = pneg %p198
        %p335 = pneg %p195
        %p336 = pneg %p219
        %p337 = pneg %p216
        %p338 = pneg %p245
        %p339 = pneg %p242
        %s340 = sand.u32 %s232, 1
        %s341 = scalar_lea.sflag [#allocation4], %s340
        %s342 = sand.u32 %s232, 1
        %s343 = scalar_lea.vmem [#allocation3], %s342
        %s344 = smul.u32 16, %s25
        %p345 = scmp.lt.s32.totalorder %s344, 31
        %s346 = scalar_select %p345, %s344, 31
        %s347 = smul.addr %s346, 8
        %s348 = scalar_lea.vmem %s0, %s347
        %s349 = smul.u32 16, %s25
        %s350 = smul.u32 16, %s25
        %p351 = scmp.lt.s32.totalorder %s350, 31
        %s352 = scalar_select %p351, %s350, 31
        %s353 = smul.addr %s352, 8
        %s354 = scalar_lea.vmem %s1, %s353
        %s355 = smul.u32 16, %s25
        %v356 = vld [vmem:[%s348] sm:$0xff]
        %v357 = vld [vmem:[%s348 + $0x8] sm:$0xff]
        %v358 = vld [vmem:[%s348 + $0x10] sm:$0xff]
        %v359 = vld [vmem:[%s348 + $0x18] sm:$0xff]
        %v360 = vld [vmem:[%s348 + $0x20] sm:$0xff]
        %v361 = vld [vmem:[%s348 + $0x28] sm:$0xff]
        %v362 = vld [vmem:[%s348 + $0x30] sm:$0xff]
        %v363 = vld [vmem:[%s348 + $0x38] sm:$0xff]
        %v364 = vld [vmem:[%s348 + $0x40] sm:$0xff]
        %v365 = vld [vmem:[%s348 + $0x48] sm:$0xff]
        %v366 = vld [vmem:[%s348 + $0x50] sm:$0xff]
        %v367 = vld [vmem:[%s348 + $0x58] sm:$0xff]
        %v368 = vld [vmem:[%s348 + $0x60] sm:$0xff]
        %v369 = vld [vmem:[%s348 + $0x68] sm:$0xff]
        %v370 = vld [vmem:[%s348 + $0x70] sm:$0xff]
        %v371 = vld [vmem:[%s348 + $0x78] sm:$0xff]
        %v372 = vld [vmem:[%s2] sm:$0xff]
        %v373 = vld [vmem:[%s2 + $0x8] sm:$0xff]
        %v374 = vld [vmem:[%s2 + $0x10] sm:$0xf]
        %v375 = vld [vmem:[%s2 + $0x18] sm:$0xf]
        %v376 = vld [vmem:[%s354] sm:$0xff]
        %v377 = vld [vmem:[%s354 + $0x8] sm:$0xff]
        %v378 = vld [vmem:[%s354 + $0x10] sm:$0xff]
        %v379 = vld [vmem:[%s354 + $0x18] sm:$0xff]
        %v380 = vld [vmem:[%s354 + $0x20] sm:$0xff]
        %v381 = vld [vmem:[%s354 + $0x28] sm:$0xff]
        %v382 = vld [vmem:[%s354 + $0x30] sm:$0xff]
        %v383 = vld [vmem:[%s354 + $0x38] sm:$0xff]
        %v384 = vld [vmem:[%s354 + $0x40] sm:$0xff]
        %v385 = vld [vmem:[%s354 + $0x48] sm:$0xff]
        %v386 = vld [vmem:[%s354 + $0x50] sm:$0xff]
        %v387 = vld [vmem:[%s354 + $0x58] sm:$0xff]
        %v388 = vld [vmem:[%s354 + $0x60] sm:$0xff]
        %v389 = vld [vmem:[%s354 + $0x68] sm:$0xff]
        %v390 = vld [vmem:[%s354 + $0x70] sm:$0xff]
        %v391 = vld [vmem:[%s354 + $0x78] sm:$0xff]
        %v392 = vld [vmem:[%s3] sm:$0xff]
        %v394 = vcombine.high %v392, %v392
        %vm395 = vcmask 31744
        %v397 = vsel %vm395, %v376, 0
        %v400 = vsel %vm395, %v377, 0
        %v403 = vsel %vm395, %v378, 0
        %v406 = vsel %vm395, %v379, 0
        %v409 = vsel %vm395, %v380, 0
        %v412 = vsel %vm395, %v381, 0
        %v415 = vsel %vm395, %v382, 0
        %v418 = vsel %vm395, %v383, 0
        %v421 = vsel %vm395, %v384, 0
        %v424 = vsel %vm395, %v385, 0
        %v427 = vsel %vm395, %v386, 0
        %v430 = vsel %vm395, %v387, 0
        %v433 = vsel %vm395, %v388, 0
        %v436 = vsel %vm395, %v389, 0
        %v439 = vsel %vm395, %v390, 0
        %v442 = vsel %vm395, %v391, 0
        %vm444 = vcmask 1043456
        %v445 = vsel %vm444, %v392, 0
        %v447 = vsel %vm444, %v394, 0
        %449 = vmatprep.subr.mxu0 0.0
        %450 = vmatpush1.msra.mxu0 0.0
        %451 = vmatprep.subr.mxu0 0.0
        %452 = vmatpush1.msra.mxu0 0.0
        %453 = vmatprep.subr.mxu0 0.0
        %454 = vmatpush1.msra.mxu0 0.0
        %455 = vmatprep.subr.mxu0 0.0
        %456 = vmatpush1.msra.mxu0 0.0
        %457 = vmatprep.subr.mxu0 0.0
        %458 = vmatpush1.msra.mxu0 0.0
        %459 = vmatprep.subr.mxu0 0.0
        %460 = vmatpush1.msra.mxu0 0.0
        %461 = vmatprep.subr.mxu0 0.0
        %462 = vmatpush1.msra.mxu0 0.0
        %463 = vmatprep.subr.mxu0 0.0
        %464 = vmatpush1.msra.mxu0 0.0
        %465 = vmatprep.subr.mxu0 0.0
        %466 = vmatpush1.msra.mxu0 0.0
        %467 = vmatprep.subr.mxu0 0.0
        %468 = vmatpush1.msra.mxu0 0.0
        %469 = vmatprep.subr.mxu0 0.0
        %470 = vmatpush1.msra.mxu0 0.0
        %471 = vmatprep.subr.mxu0 0.0
        %472 = vmatpush1.msra.mxu0 0.0
        %473 = vmatprep.subr.mxu0 0.0
        %474 = vmatpush1.msra.mxu0 0.0
        %475 = vmatprep.subr.mxu0 0.0
        %476 = vmatpush1.msra.mxu0 0.0
        %477 = vmatprep.subr.mxu0 0.0
        %478 = vmatpush1.msra.mxu0 0.0
        %479 = vmatprep.subr.mxu0 %v447
        %480 = vmatpush1.msra.mxu0 %v445
        %481 = vmatprep.subr.mxu0 0.0
        %482 = vmatpush2.msra.mxu0 0.0
        %483 = vmatprep.subr.mxu0 0.0
        %484 = vmatpush2.msra.mxu0 0.0
        %485 = vmatprep.subr.mxu0 0.0
        %486 = vmatpush2.msra.mxu0 0.0
        %487 = vmatprep.subr.mxu0 0.0
        %488 = vmatpush2.msra.mxu0 0.0
        %489 = vmatprep.subr.mxu0 0.0
        %490 = vmatpush2.msra.mxu0 0.0
        %491 = vmatprep.subr.mxu0 0.0
        %492 = vmatpush2.msra.mxu0 0.0
        %493 = vmatprep.subr.mxu0 0.0
        %494 = vmatpush2.msra.mxu0 0.0
        %495 = vmatprep.subr.mxu0 0.0
        %496 = vmatpush2.msra.mxu0 0.0
        %497 = vmatprep.subr.mxu0 0.0
        %498 = vmatpush2.msra.mxu0 0.0
        %499 = vmatprep.subr.mxu0 0.0
        %500 = vmatpush2.msra.mxu0 0.0
        %501 = vmatprep.subr.mxu0 0.0
        %502 = vmatpush2.msra.mxu0 0.0
        %503 = vmatprep.subr.mxu0 0.0
        %504 = vmatpush2.msra.mxu0 0.0
        %505 = vmatprep.subr.mxu0 0.0
        %506 = vmatpush2.msra.mxu0 0.0
        %507 = vmatprep.subr.mxu0 0.0
        %508 = vmatpush2.msra.mxu0 0.0
        %509 = vmatprep.subr.mxu0 0.0
        %510 = vmatpush2.msra.mxu0 0.0
        %511 = vmatprep.subr.mxu0 0.0
        %512 = vmatpush2.msra.mxu0 0.0
        %513 = vmatprep.mubr.f32.mxu0 0.0
        %514 = vmatmul.mubr.f32.gmra.mxu0 %v397
        %v515 = vpop.f32.mrf.mxu0
        %v516 = vadd.f32 0.0, %v515
        %v517 = vpop.f32.mrf.mxu0
        %v518 = vadd.f32 0.0, %v517
        %519 = vmatprep.mubr.f32.mxu0 0.0
        %520 = vmatmul.mubr.f32.gmra.mxu0 %v400
        %v521 = vpop.f32.mrf.mxu0
        %v522 = vadd.f32 0.0, %v521
        %v523 = vpop.f32.mrf.mxu0
        %v524 = vadd.f32 0.0, %v523
        %525 = vmatprep.mubr.f32.mxu0 0.0
        %526 = vmatmul.mubr.f32.gmra.mxu0 %v403
        %v527 = vpop.f32.mrf.mxu0
        %v528 = vadd.f32 0.0, %v527
        %v529 = vpop.f32.mrf.mxu0
        %v530 = vadd.f32 0.0, %v529
        %531 = vmatprep.mubr.f32.mxu0 0.0
        %532 = vmatmul.mubr.f32.gmra.mxu0 %v406
        %v533 = vpop.f32.mrf.mxu0
        %v534 = vadd.f32 0.0, %v533
        %v535 = vpop.f32.mrf.mxu0
        %v536 = vadd.f32 0.0, %v535
        %537 = vmatprep.mubr.f32.mxu0 0.0
        %538 = vmatmul.mubr.f32.gmra.mxu0 %v409
        %v539 = vpop.f32.mrf.mxu0
        %v540 = vadd.f32 0.0, %v539
        %v541 = vpop.f32.mrf.mxu0
        %v542 = vadd.f32 0.0, %v541
        %543 = vmatprep.mubr.f32.mxu0 0.0
        %544 = vmatmul.mubr.f32.gmra.mxu0 %v412
        %v545 = vpop.f32.mrf.mxu0
        %v546 = vadd.f32 0.0, %v545
        %v547 = vpop.f32.mrf.mxu0
        %v548 = vadd.f32 0.0, %v547
        %549 = vmatprep.mubr.f32.mxu0 0.0
        %550 = vmatmul.mubr.f32.gmra.mxu0 %v415
        %v551 = vpop.f32.mrf.mxu0
        %v552 = vadd.f32 0.0, %v551
        %v553 = vpop.f32.mrf.mxu0
        %v554 = vadd.f32 0.0, %v553
        %555 = vmatprep.mubr.f32.mxu0 0.0
        %556 = vmatmul.mubr.f32.gmra.mxu0 %v418
        %v557 = vpop.f32.mrf.mxu0
        %v558 = vadd.f32 0.0, %v557
        %v559 = vpop.f32.mrf.mxu0
        %v560 = vadd.f32 0.0, %v559
        %561 = vmatprep.mubr.f32.mxu0 0.0
        %562 = vmatmul.mubr.f32.gmra.mxu0 %v421
        %v563 = vpop.f32.mrf.mxu0
        %v564 = vadd.f32 0.0, %v563
        %v565 = vpop.f32.mrf.mxu0
        %v566 = vadd.f32 0.0, %v565
        %567 = vmatprep.mubr.f32.mxu0 0.0
        %568 = vmatmul.mubr.f32.gmra.mxu0 %v424
        %v569 = vpop.f32.mrf.mxu0
        %v570 = vadd.f32 0.0, %v569
        %v571 = vpop.f32.mrf.mxu0
        %v572 = vadd.f32 0.0, %v571
        %573 = vmatprep.mubr.f32.mxu0 0.0
        %574 = vmatmul.mubr.f32.gmra.mxu0 %v427
        %v575 = vpop.f32.mrf.mxu0
        %v576 = vadd.f32 0.0, %v575
        %v577 = vpop.f32.mrf.mxu0
        %v578 = vadd.f32 0.0, %v577
        %579 = vmatprep.mubr.f32.mxu0 0.0
        %580 = vmatmul.mubr.f32.gmra.mxu0 %v430
        %v581 = vpop.f32.mrf.mxu0
        %v582 = vadd.f32 0.0, %v581
        %v583 = vpop.f32.mrf.mxu0
        %v584 = vadd.f32 0.0, %v583
        %585 = vmatprep.mubr.f32.mxu0 0.0
        %586 = vmatmul.mubr.f32.gmra.mxu0 %v433
        %v587 = vpop.f32.mrf.mxu0
        %v588 = vadd.f32 0.0, %v587
        %v589 = vpop.f32.mrf.mxu0
        %v590 = vadd.f32 0.0, %v589
        %591 = vmatprep.mubr.f32.mxu0 0.0
        %592 = vmatmul.mubr.f32.gmra.mxu0 %v436
        %v593 = vpop.f32.mrf.mxu0
        %v594 = vadd.f32 0.0, %v593
        %v595 = vpop.f32.mrf.mxu0
        %v596 = vadd.f32 0.0, %v595
        %597 = vmatprep.mubr.f32.mxu0 0.0
        %598 = vmatmul.mubr.f32.gmra.mxu0 %v439
        %v599 = vpop.f32.mrf.mxu0
        %v600 = vadd.f32 0.0, %v599
        %v601 = vpop.f32.mrf.mxu0
        %v602 = vadd.f32 0.0, %v601
        %603 = vmatprep.mubr.f32.mxu0 0.0
        %604 = vmatmul.mubr.f32.gmra.mxu0 %v442
        %v605 = vpop.f32.mrf.mxu0
        %v606 = vadd.f32 0.0, %v605
        %v607 = vpop.f32.mrf.mxu0
        %v608 = vadd.f32 0.0, %v607
        %609 = vdwg.mxu0
        %vm610 = vcmask 97280
        %v612 = vsel %vm610, %v356, 0
        %v615 = vsel %vm610, %v357, 0
        %v618 = vsel %vm610, %v358, 0
        %v621 = vsel %vm610, %v359, 0
        %v624 = vsel %vm610, %v360, 0
        %v627 = vsel %vm610, %v361, 0
        %v630 = vsel %vm610, %v362, 0
        %v633 = vsel %vm610, %v363, 0
        %v636 = vsel %vm610, %v364, 0
        %v639 = vsel %vm610, %v365, 0
        %v642 = vsel %vm610, %v366, 0
        %v645 = vsel %vm610, %v367, 0
        %v648 = vsel %vm610, %v368, 0
        %v651 = vsel %vm610, %v369, 0
        %v654 = vsel %vm610, %v370, 0
        %v657 = vsel %vm610, %v371, 0
        %v660 = vsel %vm444, %v374, 0
        %v663 = vsel %vm444, %v375, 0
        %665 = vmatprep.subr.mxu0 0.0
        %666 = vmatpush1.msra.mxu0 0.0
        %667 = vmatprep.subr.mxu0 0.0
        %668 = vmatpush1.msra.mxu0 0.0
        %669 = vmatprep.subr.mxu0 0.0
        %670 = vmatpush1.msra.mxu0 0.0
        %671 = vmatprep.subr.mxu0 0.0
        %672 = vmatpush1.msra.mxu0 0.0
        %673 = vmatprep.subr.mxu0 0.0
        %674 = vmatpush1.msra.mxu0 0.0
        %675 = vmatprep.subr.mxu0 0.0
        %676 = vmatpush1.msra.mxu0 0.0
        %677 = vmatprep.subr.mxu0 0.0
        %678 = vmatpush1.msra.mxu0 0.0
        %679 = vmatprep.subr.mxu0 0.0
        %680 = vmatpush1.msra.mxu0 0.0
        %681 = vmatprep.subr.mxu0 0.0
        %682 = vmatpush1.msra.mxu0 0.0
        %683 = vmatprep.subr.mxu0 0.0
        %684 = vmatpush1.msra.mxu0 0.0
        %685 = vmatprep.subr.mxu0 0.0
        %686 = vmatpush1.msra.mxu0 0.0
        %687 = vmatprep.subr.mxu0 0.0
        %688 = vmatpush1.msra.mxu0 0.0
        %689 = vmatprep.subr.mxu0 0.0
        %690 = vmatpush1.msra.mxu0 0.0
        %691 = vmatprep.subr.mxu0 0.0
        %692 = vmatpush1.msra.mxu0 0.0
        %693 = vmatprep.subr.mxu0 %v663
        %694 = vmatpush1.msra.mxu0 %v660
        %695 = vmatprep.subr.mxu0 %v373
        %696 = vmatpush1.msra.mxu0 %v372
        %697 = vmatprep.subr.mxu0 0.0
        %698 = vmatpush2.msra.mxu0 0.0
        %699 = vmatprep.subr.mxu0 0.0
        %700 = vmatpush2.msra.mxu0 0.0
        %701 = vmatprep.subr.mxu0 0.0
        %702 = vmatpush2.msra.mxu0 0.0
        %703 = vmatprep.subr.mxu0 0.0
        %704 = vmatpush2.msra.mxu0 0.0
        %705 = vmatprep.subr.mxu0 0.0
        %706 = vmatpush2.msra.mxu0 0.0
        %707 = vmatprep.subr.mxu0 0.0
        %708 = vmatpush2.msra.mxu0 0.0
        %709 = vmatprep.subr.mxu0 0.0
        %710 = vmatpush2.msra.mxu0 0.0
        %711 = vmatprep.subr.mxu0 0.0
        %712 = vmatpush2.msra.mxu0 0.0
        %713 = vmatprep.subr.mxu0 0.0
        %714 = vmatpush2.msra.mxu0 0.0
        %715 = vmatprep.subr.mxu0 0.0
        %716 = vmatpush2.msra.mxu0 0.0
        %717 = vmatprep.subr.mxu0 0.0
        %718 = vmatpush2.msra.mxu0 0.0
        %719 = vmatprep.subr.mxu0 0.0
        %720 = vmatpush2.msra.mxu0 0.0
        %721 = vmatprep.subr.mxu0 0.0
        %722 = vmatpush2.msra.mxu0 0.0
        %723 = vmatprep.subr.mxu0 0.0
        %724 = vmatpush2.msra.mxu0 0.0
        %725 = vmatprep.subr.mxu0 0.0
        %726 = vmatpush2.msra.mxu0 0.0
        %727 = vmatprep.subr.mxu0 0.0
        %728 = vmatpush2.msra.mxu0 0.0
        %729 = vmatprep.mubr.f32.mxu0 0.0
        %730 = vmatmul.mubr.f32.gmra.mxu0 %v612
        %v731 = vpop.f32.mrf.mxu0
        %v732 = vadd.f32 %v516, %v731
        %v733 = vpop.f32.mrf.mxu0
        %v734 = vadd.f32 %v518, %v733
        %735 = vmatprep.mubr.f32.mxu0 0.0
        %736 = vmatmul.mubr.f32.gmra.mxu0 %v615
        %v737 = vpop.f32.mrf.mxu0
        %v738 = vadd.f32 %v522, %v737
        %v739 = vpop.f32.mrf.mxu0
        %v740 = vadd.f32 %v524, %v739
        %741 = vmatprep.mubr.f32.mxu0 0.0
        %742 = vmatmul.mubr.f32.gmra.mxu0 %v618
        %v743 = vpop.f32.mrf.mxu0
        %v744 = vadd.f32 %v528, %v743
        %v745 = vpop.f32.mrf.mxu0
        %v746 = vadd.f32 %v530, %v745
        %747 = vmatprep.mubr.f32.mxu0 0.0
        %748 = vmatmul.mubr.f32.gmra.mxu0 %v621
        %v749 = vpop.f32.mrf.mxu0
        %v750 = vadd.f32 %v534, %v749
        %v751 = vpop.f32.mrf.mxu0
        %v752 = vadd.f32 %v536, %v751
        %753 = vmatprep.mubr.f32.mxu0 0.0
        %754 = vmatmul.mubr.f32.gmra.mxu0 %v624
        %v755 = vpop.f32.mrf.mxu0
        %v756 = vadd.f32 %v540, %v755
        %v757 = vpop.f32.mrf.mxu0
        %v758 = vadd.f32 %v542, %v757
        %759 = vmatprep.mubr.f32.mxu0 0.0
        %760 = vmatmul.mubr.f32.gmra.mxu0 %v627
        %v761 = vpop.f32.mrf.mxu0
        %v762 = vadd.f32 %v546, %v761
        %v763 = vpop.f32.mrf.mxu0
        %v764 = vadd.f32 %v548, %v763
        %765 = vmatprep.mubr.f32.mxu0 0.0
        %766 = vmatmul.mubr.f32.gmra.mxu0 %v630
        %v767 = vpop.f32.mrf.mxu0
        %v768 = vadd.f32 %v552, %v767
        %v769 = vpop.f32.mrf.mxu0
        %v770 = vadd.f32 %v554, %v769
        %771 = vmatprep.mubr.f32.mxu0 0.0
        %772 = vmatmul.mubr.f32.gmra.mxu0 %v633
        %v773 = vpop.f32.mrf.mxu0
        %v774 = vadd.f32 %v558, %v773
        %v775 = vpop.f32.mrf.mxu0
        %v776 = vadd.f32 %v560, %v775
        %777 = vmatprep.mubr.f32.mxu0 0.0
        %778 = vmatmul.mubr.f32.gmra.mxu0 %v636
        %v779 = vpop.f32.mrf.mxu0
        %v780 = vadd.f32 %v564, %v779
        %v781 = vpop.f32.mrf.mxu0
        %v782 = vadd.f32 %v566, %v781
        %783 = vmatprep.mubr.f32.mxu0 0.0
        %784 = vmatmul.mubr.f32.gmra.mxu0 %v639
        %v785 = vpop.f32.mrf.mxu0
        %v786 = vadd.f32 %v570, %v785
        %v787 = vpop.f32.mrf.mxu0
        %v788 = vadd.f32 %v572, %v787
        %789 = vmatprep.mubr.f32.mxu0 0.0
        %790 = vmatmul.mubr.f32.gmra.mxu0 %v642
        %v791 = vpop.f32.mrf.mxu0
        %v792 = vadd.f32 %v576, %v791
        %v793 = vpop.f32.mrf.mxu0
        %v794 = vadd.f32 %v578, %v793
        %795 = vmatprep.mubr.f32.mxu0 0.0
        %796 = vmatmul.mubr.f32.gmra.mxu0 %v645
        %v797 = vpop.f32.mrf.mxu0
        %v798 = vadd.f32 %v582, %v797
        %v799 = vpop.f32.mrf.mxu0
        %v800 = vadd.f32 %v584, %v799
        %801 = vmatprep.mubr.f32.mxu0 0.0
        %802 = vmatmul.mubr.f32.gmra.mxu0 %v648
        %v803 = vpop.f32.mrf.mxu0
        %v804 = vadd.f32 %v588, %v803
        %v805 = vpop.f32.mrf.mxu0
        %v806 = vadd.f32 %v590, %v805
        %807 = vmatprep.mubr.f32.mxu0 0.0
        %808 = vmatmul.mubr.f32.gmra.mxu0 %v651
        %v809 = vpop.f32.mrf.mxu0
        %v810 = vadd.f32 %v594, %v809
        %v811 = vpop.f32.mrf.mxu0
        %v812 = vadd.f32 %v596, %v811
        %813 = vmatprep.mubr.f32.mxu0 0.0
        %814 = vmatmul.mubr.f32.gmra.mxu0 %v654
        %v815 = vpop.f32.mrf.mxu0
        %v816 = vadd.f32 %v600, %v815
        %v817 = vpop.f32.mrf.mxu0
        %v818 = vadd.f32 %v602, %v817
        %819 = vmatprep.mubr.f32.mxu0 0.0
        %820 = vmatmul.mubr.f32.gmra.mxu0 %v657
        %v821 = vpop.f32.mrf.mxu0
        %v822 = vadd.f32 %v606, %v821
        %v823 = vpop.f32.mrf.mxu0
        %v824 = vadd.f32 %v608, %v823
        %825 = vdwg.mxu0
        %v826 = vld [vmem:[%s4] sm:$0x3]
        %v828 = vlaneseq
        %v829 = vshrl.u32 %v828, 7
        %v830 = vsub.s32 0, %v829
        %v831 = vrot.slane %v826, %v830
        %v832 = vlaneseq
        %v833 = vshrl.u32 %v832, 7
        %v834 = vsub.s32 1, %v833
        %v835 = vrot.slane %v826, %v834
        %v838 = vadd.f32 %v732, %v831
        %v839 = vadd.f32 %v734, %v835
        %v840 = vadd.f32 %v738, %v831
        %v841 = vadd.f32 %v740, %v835
        %v842 = vadd.f32 %v744, %v831
        %v843 = vadd.f32 %v746, %v835
        %v844 = vadd.f32 %v750, %v831
        %v845 = vadd.f32 %v752, %v835
        %v846 = vadd.f32 %v756, %v831
        %v847 = vadd.f32 %v758, %v835
        %v848 = vadd.f32 %v762, %v831
        %v849 = vadd.f32 %v764, %v835
        %v850 = vadd.f32 %v768, %v831
        %v851 = vadd.f32 %v770, %v835
        %v852 = vadd.f32 %v774, %v831
        %v853 = vadd.f32 %v776, %v835
        %v854 = vadd.f32 %v780, %v831
        %v855 = vadd.f32 %v782, %v835
        %v856 = vadd.f32 %v786, %v831
        %v857 = vadd.f32 %v788, %v835
        %v858 = vadd.f32 %v792, %v831
        %v859 = vadd.f32 %v794, %v835
        %v860 = vadd.f32 %v798, %v831
        %v861 = vadd.f32 %v800, %v835
        %v862 = vadd.f32 %v804, %v831
        %v863 = vadd.f32 %v806, %v835
        %v864 = vadd.f32 %v810, %v831
        %v865 = vadd.f32 %v812, %v835
        %v866 = vadd.f32 %v816, %v831
        %v867 = vadd.f32 %v818, %v835
        %v868 = vadd.f32 %v822, %v831
        %v869 = vadd.f32 %v824, %v835
        %v870 = vmax.f32 %v838, 0.0
        %v871 = vmax.f32 %v839, 0.0
        %v872 = vmax.f32 %v840, 0.0
        %v873 = vmax.f32 %v841, 0.0
        %v874 = vmax.f32 %v842, 0.0
        %v875 = vmax.f32 %v843, 0.0
        %v876 = vmax.f32 %v844, 0.0
        %v877 = vmax.f32 %v845, 0.0
        %v878 = vmax.f32 %v846, 0.0
        %v879 = vmax.f32 %v847, 0.0
        %v880 = vmax.f32 %v848, 0.0
        %v881 = vmax.f32 %v849, 0.0
        %v882 = vmax.f32 %v850, 0.0
        %v883 = vmax.f32 %v851, 0.0
        %v884 = vmax.f32 %v852, 0.0
        %v885 = vmax.f32 %v853, 0.0
        %v886 = vmax.f32 %v854, 0.0
        %v887 = vmax.f32 %v855, 0.0
        %v888 = vmax.f32 %v856, 0.0
        %v889 = vmax.f32 %v857, 0.0
        %v890 = vmax.f32 %v858, 0.0
        %v891 = vmax.f32 %v859, 0.0
        %v892 = vmax.f32 %v860, 0.0
        %v893 = vmax.f32 %v861, 0.0
        %v894 = vmax.f32 %v862, 0.0
        %v895 = vmax.f32 %v863, 0.0
        %v896 = vmax.f32 %v864, 0.0
        %v897 = vmax.f32 %v865, 0.0
        %v898 = vmax.f32 %v866, 0.0
        %v899 = vmax.f32 %v867, 0.0
        %v900 = vmax.f32 %v868, 0.0
        %v901 = vmax.f32 %v869, 0.0
        %v902 = vld [vmem:[%s5] sm:$0xff]
        %v903 = vld [vmem:[%s5 + $0x8] sm:$0xff]
        %v904 = vld [vmem:[%s5 + $0x10] sm:$0xff]
        %v905 = vld [vmem:[%s5 + $0x18] sm:$0xff]
        %v906 = vld [vmem:[%s5 + $0x20] sm:$0xff]
        %v907 = vld [vmem:[%s5 + $0x28] sm:$0xff]
        %v908 = vld [vmem:[%s5 + $0x30] sm:$0xff]
        %v909 = vld [vmem:[%s5 + $0x38] sm:$0xff]
        %v910 = vld [vmem:[%s5 + $0x40] sm:$0xff]
        %v911 = vld [vmem:[%s5 + $0x48] sm:$0xff]
        %v912 = vld [vmem:[%s5 + $0x50] sm:$0xff]
        %v913 = vld [vmem:[%s5 + $0x58] sm:$0xff]
        %v914 = vld [vmem:[%s5 + $0x60] sm:$0xff]
        %v915 = vld [vmem:[%s5 + $0x68] sm:$0xff]
        %v916 = vld [vmem:[%s5 + $0x70] sm:$0xff]
        %v917 = vld [vmem:[%s5 + $0x78] sm:$0xff]
        %v918 = vld [vmem:[%s5 + $0x80] sm:$0xff]
        %v919 = vld [vmem:[%s5 + $0x88] sm:$0xff]
        %v920 = vld [vmem:[%s5 + $0x90] sm:$0xff]
        %v921 = vld [vmem:[%s5 + $0x98] sm:$0xff]
        %v922 = vld [vmem:[%s5 + $0xa0] sm:$0xff]
        %v923 = vld [vmem:[%s5 + $0xa8] sm:$0xff]
        %v924 = vld [vmem:[%s5 + $0xb0] sm:$0xff]
        %v925 = vld [vmem:[%s5 + $0xb8] sm:$0xff]
        %v926 = vld [vmem:[%s5 + $0xc0] sm:$0xff]
        %v927 = vld [vmem:[%s5 + $0xc8] sm:$0xff]
        %v928 = vld [vmem:[%s5 + $0xd0] sm:$0xff]
        %v929 = vld [vmem:[%s5 + $0xd8] sm:$0xff]
        %v930 = vld [vmem:[%s5 + $0xe0] sm:$0xff]
        %v931 = vld [vmem:[%s5 + $0xe8] sm:$0xff]
        %v932 = vld [vmem:[%s5 + $0xf0] sm:$0xff]
        %v933 = vld [vmem:[%s5 + $0xf8] sm:$0xff]
        %v934 = vld [vmem:[%s5 + $0x100] sm:$0xff]
        %v935 = vld [vmem:[%s5 + $0x108] sm:$0xff]
        %v936 = vld [vmem:[%s5 + $0x110] sm:$0xff]
        %v937 = vld [vmem:[%s5 + $0x118] sm:$0xff]
        %v938 = vld [vmem:[%s5 + $0x120] sm:$0xff]
        %v939 = vld [vmem:[%s5 + $0x128] sm:$0xff]
        %v940 = vld [vmem:[%s5 + $0x130] sm:$0xff]
        %v941 = vld [vmem:[%s5 + $0x138] sm:$0xff]
        %v942 = vld [vmem:[%s5 + $0x140] sm:$0xff]
        %v943 = vld [vmem:[%s5 + $0x148] sm:$0xff]
        %v944 = vld [vmem:[%s5 + $0x150] sm:$0xff]
        %v945 = vld [vmem:[%s5 + $0x158] sm:$0xff]
        %v946 = vld [vmem:[%s5 + $0x160] sm:$0xff]
        %v947 = vld [vmem:[%s5 + $0x168] sm:$0xff]
        %v948 = vld [vmem:[%s5 + $0x170] sm:$0xff]
        %v949 = vld [vmem:[%s5 + $0x178] sm:$0xff]
        %v950 = vld [vmem:[%s5 + $0x180] sm:$0xff]
        %v951 = vld [vmem:[%s5 + $0x188] sm:$0xff]
        %v952 = vld [vmem:[%s5 + $0x190] sm:$0xff]
        %v953 = vld [vmem:[%s5 + $0x198] sm:$0xff]
        %v954 = vld [vmem:[%s5 + $0x1a0] sm:$0xff]
        %v955 = vld [vmem:[%s5 + $0x1a8] sm:$0xff]
        %v956 = vld [vmem:[%s5 + $0x1b0] sm:$0xff]
        %v957 = vld [vmem:[%s5 + $0x1b8] sm:$0xff]
        %v958 = vld [vmem:[%s5 + $0x1c0] sm:$0xff]
        %v959 = vld [vmem:[%s5 + $0x1c8] sm:$0xff]
        %v960 = vld [vmem:[%s5 + $0x1d0] sm:$0xff]
        %v961 = vld [vmem:[%s5 + $0x1d8] sm:$0xff]
        %v962 = vld [vmem:[%s5 + $0x1e0] sm:$0xff]
        %v963 = vld [vmem:[%s5 + $0x1e8] sm:$0xff]
        %v964 = vld [vmem:[%s5 + $0x1f0] sm:$0xff]
        %v965 = vld [vmem:[%s5 + $0x1f8] sm:$0xff]
        %v966 = vld [vmem:[%s6] sm:$0x3]
        %v968 = vlaneseq
        %v969 = vshrl.u32 %v968, 7
        %v970 = vsub.s32 0, %v969
        %v971 = vrot.slane %v966, %v970
        %v972 = vlaneseq
        %v973 = vshrl.u32 %v972, 7
        %v974 = vsub.s32 1, %v973
        %v975 = vrot.slane %v966, %v974
        %978 = vmatprep.subr.mxu0 %v933
        %979 = vmatpush1.msra.mxu0 %v932
        %980 = vmatprep.subr.mxu0 %v931
        %981 = vmatpush1.msra.mxu0 %v930
        %982 = vmatprep.subr.mxu0 %v929
        %983 = vmatpush1.msra.mxu0 %v928
        %984 = vmatprep.subr.mxu0 %v927
        %985 = vmatpush1.msra.mxu0 %v926
        %986 = vmatprep.subr.mxu0 %v925
        %987 = vmatpush1.msra.mxu0 %v924
        %988 = vmatprep.subr.mxu0 %v923
        %989 = vmatpush1.msra.mxu0 %v922
        %990 = vmatprep.subr.mxu0 %v921
        %991 = vmatpush1.msra.mxu0 %v920
        %992 = vmatprep.subr.mxu0 %v919
        %993 = vmatpush1.msra.mxu0 %v918
        %994 = vmatprep.subr.mxu0 %v917
        %995 = vmatpush1.msra.mxu0 %v916
        %996 = vmatprep.subr.mxu0 %v915
        %997 = vmatpush1.msra.mxu0 %v914
        %998 = vmatprep.subr.mxu0 %v913
        %999 = vmatpush1.msra.mxu0 %v912
        %1000 = vmatprep.subr.mxu0 %v911
        %1001 = vmatpush1.msra.mxu0 %v910
        %1002 = vmatprep.subr.mxu0 %v909
        %1003 = vmatpush1.msra.mxu0 %v908
        %1004 = vmatprep.subr.mxu0 %v907
        %1005 = vmatpush1.msra.mxu0 %v906
        %1006 = vmatprep.subr.mxu0 %v905
        %1007 = vmatpush1.msra.mxu0 %v904
        %1008 = vmatprep.subr.mxu0 %v903
        %1009 = vmatpush1.msra.mxu0 %v902
        %1010 = vmatprep.subr.mxu0 %v965
        %1011 = vmatpush2.msra.mxu0 %v964
        %1012 = vmatprep.subr.mxu0 %v963
        %1013 = vmatpush2.msra.mxu0 %v962
        %1014 = vmatprep.subr.mxu0 %v961
        %1015 = vmatpush2.msra.mxu0 %v960
        %1016 = vmatprep.subr.mxu0 %v959
        %1017 = vmatpush2.msra.mxu0 %v958
        %1018 = vmatprep.subr.mxu0 %v957
        %1019 = vmatpush2.msra.mxu0 %v956
        %1020 = vmatprep.subr.mxu0 %v955
        %1021 = vmatpush2.msra.mxu0 %v954
        %1022 = vmatprep.subr.mxu0 %v953
        %1023 = vmatpush2.msra.mxu0 %v952
        %1024 = vmatprep.subr.mxu0 %v951
        %1025 = vmatpush2.msra.mxu0 %v950
        %1026 = vmatprep.subr.mxu0 %v949
        %1027 = vmatpush2.msra.mxu0 %v948
        %1028 = vmatprep.subr.mxu0 %v947
        %1029 = vmatpush2.msra.mxu0 %v946
        %1030 = vmatprep.subr.mxu0 %v945
        %1031 = vmatpush2.msra.mxu0 %v944
        %1032 = vmatprep.subr.mxu0 %v943
        %1033 = vmatpush2.msra.mxu0 %v942
        %1034 = vmatprep.subr.mxu0 %v941
        %1035 = vmatpush2.msra.mxu0 %v940
        %1036 = vmatprep.subr.mxu0 %v939
        %1037 = vmatpush2.msra.mxu0 %v938
        %1038 = vmatprep.subr.mxu0 %v937
        %1039 = vmatpush2.msra.mxu0 %v936
        %1040 = vmatprep.subr.mxu0 %v935
        %1041 = vmatpush2.msra.mxu0 %v934
        %1042 = vmatprep.mubr.f32.mxu0 %v871
        %1043 = vmatmul.mubr.f32.gmra.mxu0 %v870
        %v1044 = vpop.f32.mrf.mxu0
        %v1045 = vadd.f32 %v971, %v1044
        %v1046 = vpop.f32.mrf.mxu0
        %v1047 = vadd.f32 %v975, %v1046
        %1048 = vmatprep.mubr.f32.mxu0 %v873
        %1049 = vmatmul.mubr.f32.gmra.mxu0 %v872
        %v1050 = vpop.f32.mrf.mxu0
        %v1051 = vadd.f32 %v971, %v1050
        %v1052 = vpop.f32.mrf.mxu0
        %v1053 = vadd.f32 %v975, %v1052
        %1054 = vmatprep.mubr.f32.mxu0 %v875
        %1055 = vmatmul.mubr.f32.gmra.mxu0 %v874
        %v1056 = vpop.f32.mrf.mxu0
        %v1057 = vadd.f32 %v971, %v1056
        %v1058 = vpop.f32.mrf.mxu0
        %v1059 = vadd.f32 %v975, %v1058
        %1060 = vmatprep.mubr.f32.mxu0 %v877
        %1061 = vmatmul.mubr.f32.gmra.mxu0 %v876
        %v1062 = vpop.f32.mrf.mxu0
        %v1063 = vadd.f32 %v971, %v1062
        %v1064 = vpop.f32.mrf.mxu0
        %v1065 = vadd.f32 %v975, %v1064
        %1066 = vmatprep.mubr.f32.mxu0 %v879
        %1067 = vmatmul.mubr.f32.gmra.mxu0 %v878
        %v1068 = vpop.f32.mrf.mxu0
        %v1069 = vadd.f32 %v971, %v1068
        %v1070 = vpop.f32.mrf.mxu0
        %v1071 = vadd.f32 %v975, %v1070
        %1072 = vmatprep.mubr.f32.mxu0 %v881
        %1073 = vmatmul.mubr.f32.gmra.mxu0 %v880
        %v1074 = vpop.f32.mrf.mxu0
        %v1075 = vadd.f32 %v971, %v1074
        %v1076 = vpop.f32.mrf.mxu0
        %v1077 = vadd.f32 %v975, %v1076
        %1078 = vmatprep.mubr.f32.mxu0 %v883
        %1079 = vmatmul.mubr.f32.gmra.mxu0 %v882
        %v1080 = vpop.f32.mrf.mxu0
        %v1081 = vadd.f32 %v971, %v1080
        %v1082 = vpop.f32.mrf.mxu0
        %v1083 = vadd.f32 %v975, %v1082
        %1084 = vmatprep.mubr.f32.mxu0 %v885
        %1085 = vmatmul.mubr.f32.gmra.mxu0 %v884
        %v1086 = vpop.f32.mrf.mxu0
        %v1087 = vadd.f32 %v971, %v1086
        %v1088 = vpop.f32.mrf.mxu0
        %v1089 = vadd.f32 %v975, %v1088
        %1090 = vmatprep.mubr.f32.mxu0 %v887
        %1091 = vmatmul.mubr.f32.gmra.mxu0 %v886
        %v1092 = vpop.f32.mrf.mxu0
        %v1093 = vadd.f32 %v971, %v1092
        %v1094 = vpop.f32.mrf.mxu0
        %v1095 = vadd.f32 %v975, %v1094
        %1096 = vmatprep.mubr.f32.mxu0 %v889
        %1097 = vmatmul.mubr.f32.gmra.mxu0 %v888
        %v1098 = vpop.f32.mrf.mxu0
        %v1099 = vadd.f32 %v971, %v1098
        %v1100 = vpop.f32.mrf.mxu0
        %v1101 = vadd.f32 %v975, %v1100
        %1102 = vmatprep.mubr.f32.mxu0 %v891
        %1103 = vmatmul.mubr.f32.gmra.mxu0 %v890
        %v1104 = vpop.f32.mrf.mxu0
        %v1105 = vadd.f32 %v971, %v1104
        %v1106 = vpop.f32.mrf.mxu0
        %v1107 = vadd.f32 %v975, %v1106
        %1108 = vmatprep.mubr.f32.mxu0 %v893
        %1109 = vmatmul.mubr.f32.gmra.mxu0 %v892
        %v1110 = vpop.f32.mrf.mxu0
        %v1111 = vadd.f32 %v971, %v1110
        %v1112 = vpop.f32.mrf.mxu0
        %v1113 = vadd.f32 %v975, %v1112
        %1114 = vmatprep.mubr.f32.mxu0 %v895
        %1115 = vmatmul.mubr.f32.gmra.mxu0 %v894
        %v1116 = vpop.f32.mrf.mxu0
        %v1117 = vadd.f32 %v971, %v1116
        %v1118 = vpop.f32.mrf.mxu0
        %v1119 = vadd.f32 %v975, %v1118
        %1120 = vmatprep.mubr.f32.mxu0 %v897
        %1121 = vmatmul.mubr.f32.gmra.mxu0 %v896
        %v1122 = vpop.f32.mrf.mxu0
        %v1123 = vadd.f32 %v971, %v1122
        %v1124 = vpop.f32.mrf.mxu0
        %v1125 = vadd.f32 %v975, %v1124
        %1126 = vmatprep.mubr.f32.mxu0 %v899
        %1127 = vmatmul.mubr.f32.gmra.mxu0 %v898
        %v1128 = vpop.f32.mrf.mxu0
        %v1129 = vadd.f32 %v971, %v1128
        %v1130 = vpop.f32.mrf.mxu0
        %v1131 = vadd.f32 %v975, %v1130
        %1132 = vmatprep.mubr.f32.mxu0 %v901
        %1133 = vmatmul.mubr.f32.gmra.mxu0 %v900
        %v1134 = vpop.f32.mrf.mxu0
        %v1135 = vadd.f32 %v971, %v1134
        %v1136 = vpop.f32.mrf.mxu0
        %v1137 = vadd.f32 %v975, %v1136
        %1138 = vdwg.mxu0
        %v1139 = vmax.f32 %v1045, 0.0
        %v1140 = vmax.f32 %v1047, 0.0
        %v1141 = vmax.f32 %v1051, 0.0
        %v1142 = vmax.f32 %v1053, 0.0
        %v1143 = vmax.f32 %v1057, 0.0
        %v1144 = vmax.f32 %v1059, 0.0
        %v1145 = vmax.f32 %v1063, 0.0
        %v1146 = vmax.f32 %v1065, 0.0
        %v1147 = vmax.f32 %v1069, 0.0
        %v1148 = vmax.f32 %v1071, 0.0
        %v1149 = vmax.f32 %v1075, 0.0
        %v1150 = vmax.f32 %v1077, 0.0
        %v1151 = vmax.f32 %v1081, 0.0
        %v1152 = vmax.f32 %v1083, 0.0
        %v1153 = vmax.f32 %v1087, 0.0
        %v1154 = vmax.f32 %v1089, 0.0
        %v1155 = vmax.f32 %v1093, 0.0
        %v1156 = vmax.f32 %v1095, 0.0
        %v1157 = vmax.f32 %v1099, 0.0
        %v1158 = vmax.f32 %v1101, 0.0
        %v1159 = vmax.f32 %v1105, 0.0
        %v1160 = vmax.f32 %v1107, 0.0
        %v1161 = vmax.f32 %v1111, 0.0
        %v1162 = vmax.f32 %v1113, 0.0
        %v1163 = vmax.f32 %v1117, 0.0
        %v1164 = vmax.f32 %v1119, 0.0
        %v1165 = vmax.f32 %v1123, 0.0
        %v1166 = vmax.f32 %v1125, 0.0
        %v1167 = vmax.f32 %v1129, 0.0
        %v1168 = vmax.f32 %v1131, 0.0
        %v1169 = vmax.f32 %v1135, 0.0
        %v1170 = vmax.f32 %v1137, 0.0
        %v1171 = vld [vmem:[%s7] sm:$0x3]
        %v1172 = vld [vmem:[#allocation2] sm:$0x1]
        %1174 = vset.pattern.permute.xlu0 0
        %1175 = vperm.xlu0 %1174, %v1172
        %v1176 = vpop.permute.xlu0 %1175
        %v1178 = vlaneseq
        %v1179 = vshrl.u32 %v1178, 7
        %v1180 = vsub.s32 0, %v1179
        %v1181 = vrot.slane %v1176, %v1180
        %v1183 = vlaneseq
        %v1184 = vshrl.u32 %v1183, 7
        %v1185 = vsub.s32 0, %v1184
        %v1186 = vrot.slane %v1171, %v1185
        %v1187 = vlaneseq
        %v1188 = vshrl.u32 %v1187, 7
        %v1189 = vsub.s32 1, %v1188
        %v1190 = vrot.slane %v1171, %v1189
        %1193 = vmatprep.subr.mxu0 %v1170
        %1194 = vmatpush1.xpose.msra.mxu0 %v1169
        %1195 = vmatprep.subr.mxu0 %v1168
        %1196 = vmatpush1.xpose.msra.mxu0 %v1167
        %1197 = vmatprep.subr.mxu0 %v1166
        %1198 = vmatpush1.xpose.msra.mxu0 %v1165
        %1199 = vmatprep.subr.mxu0 %v1164
        %1200 = vmatpush1.xpose.msra.mxu0 %v1163
        %1201 = vmatprep.subr.mxu0 %v1162
        %1202 = vmatpush1.xpose.msra.mxu0 %v1161
        %1203 = vmatprep.subr.mxu0 %v1160
        %1204 = vmatpush1.xpose.msra.mxu0 %v1159
        %1205 = vmatprep.subr.mxu0 %v1158
        %1206 = vmatpush1.xpose.msra.mxu0 %v1157
        %1207 = vmatprep.subr.mxu0 %v1156
        %1208 = vmatpush1.xpose.msra.mxu0 %v1155
        %1209 = vmatprep.subr.mxu0 %v1154
        %1210 = vmatpush1.xpose.msra.mxu0 %v1153
        %1211 = vmatprep.subr.mxu0 %v1152
        %1212 = vmatpush1.xpose.msra.mxu0 %v1151
        %1213 = vmatprep.subr.mxu0 %v1150
        %1214 = vmatpush1.xpose.msra.mxu0 %v1149
        %1215 = vmatprep.subr.mxu0 %v1148
        %1216 = vmatpush1.xpose.msra.mxu0 %v1147
        %1217 = vmatprep.subr.mxu0 %v1146
        %1218 = vmatpush1.xpose.msra.mxu0 %v1145
        %1219 = vmatprep.subr.mxu0 %v1144
        %1220 = vmatpush1.xpose.msra.mxu0 %v1143
        %1221 = vmatprep.subr.mxu0 %v1142
        %1222 = vmatpush1.xpose.msra.mxu0 %v1141
        %1223 = vmatprep.subr.mxu0 %v1140
        %1224 = vmatpush1.xpose.msra.mxu0 %v1139
        %1225 = vmatprep.subr.mxu0 0.0
        %1226 = vmatpush2.xpose.msra.mxu0 0.0
        %1227 = vmatprep.subr.mxu0 0.0
        %1228 = vmatpush2.xpose.msra.mxu0 0.0
        %1229 = vmatprep.subr.mxu0 0.0
        %1230 = vmatpush2.xpose.msra.mxu0 0.0
        %1231 = vmatprep.subr.mxu0 0.0
        %1232 = vmatpush2.xpose.msra.mxu0 0.0
        %1233 = vmatprep.subr.mxu0 0.0
        %1234 = vmatpush2.xpose.msra.mxu0 0.0
        %1235 = vmatprep.subr.mxu0 0.0
        %1236 = vmatpush2.xpose.msra.mxu0 0.0
        %1237 = vmatprep.subr.mxu0 0.0
        %1238 = vmatpush2.xpose.msra.mxu0 0.0
        %1239 = vmatprep.subr.mxu0 0.0
        %1240 = vmatpush2.xpose.msra.mxu0 0.0
        %1241 = vmatprep.subr.mxu0 0.0
        %1242 = vmatpush2.xpose.msra.mxu0 0.0
        %1243 = vmatprep.subr.mxu0 0.0
        %1244 = vmatpush2.xpose.msra.mxu0 0.0
        %1245 = vmatprep.subr.mxu0 0.0
        %1246 = vmatpush2.xpose.msra.mxu0 0.0
        %1247 = vmatprep.subr.mxu0 0.0
        %1248 = vmatpush2.xpose.msra.mxu0 0.0
        %1249 = vmatprep.subr.mxu0 0.0
        %1250 = vmatpush2.xpose.msra.mxu0 0.0
        %1251 = vmatprep.subr.mxu0 0.0
        %1252 = vmatpush2.xpose.msra.mxu0 0.0
        %1253 = vmatprep.subr.mxu0 0.0
        %1254 = vmatpush2.xpose.msra.mxu0 0.0
        %1255 = vmatprep.subr.mxu0 0.0
        %1256 = vmatpush2.xpose.msra.mxu0 0.0
        %1257 = vmatprep.mubr.f32.mxu0 %v1190
        %1258 = vmatmul.mubr.f32.gmra.mxu0 %v1186
        %v1259 = vpop.f32.mrf.mxu0
        %v1260 = vadd.f32 %v1181, %v1259
        %v1261 = vpop.f32.mrf.mxu0
        %1262 = vdwg.mxu0
        %1263 = vst [vmem:[%s343] sm:$0x1] %v1260
        %s1264 = sand.u32 %s232, 1
        %s1265 = scalar_lea.sflag [#allocation4], %s1264
        %s1266 = sand.u32 %s232, 1
        %s1267 = scalar_lea.vmem [#allocation3], %s1266
        // Predicated region
        $region57: #{tpu_custom_call.1} parent=55 // pred_check
          %p1268 = pneg %p242
        $region58: #{tpu_custom_call.1} parent=55 // pred_check_branch
          %1270 = sbr.rel (%p1268) target = $region60
        $region59: #{tpu_custom_call.1} parent=55 // pred_region
          %s1272 = ssub.s32 16, 16
          %1273 = vsyncadd %s1265, %s1272
          %s1274 = smul.addr %s25, 16
          %s1275 = scalar_lea.hbm %s9, %s1274
          %s1277 = sshll.u32 %s1267, 4
          %s1278 = int_to_ptr.vmem [resolvable:$true] %s1277
          %1280 = dma.vmem_to_hbm [thread:$0]  %s1278, 16, %s1275, %s1265
        $region60: #{tpu_custom_call.1} parent=55 // pred_fallthru
          _
      $region56: #{tpu_custom_call.1} parent=5 // pred_fallthru
        _
      %p1281 = scmp.le.s32.totalorder 2, %s20
      // Predicated region
      $region61: #{tpu_custom_call.1} parent=5 // pred_check
        %p1282 = pneg %p1281
      $region62: #{tpu_custom_call.1} parent=5 // pred_check_branch
        %1284 = sbr.rel (%p1282) target = $region64
      $region63: #{tpu_custom_call.1} parent=5 // pred_region
        %s1285 = ssub.s32 %s20, 2
        // Predicated region
        $region65: #{tpu_custom_call.1} parent=63 // pred_check
          %p1286 = pneg %p248
        $region66: #{tpu_custom_call.1} parent=63 // pred_check_branch
          %1288 = sbr.rel (%p1286) target = $region68
        $region67: #{tpu_custom_call.1} parent=63 // pred_region
          %s1289 = sand.u32 %s233, 1
          %s1290 = scalar_lea.sflag [#allocation4], %s1289
          %s1291 = sand.u32 %s233, 1
          %s1292 = scalar_lea.vmem [#allocation3], %s1291
          %1293 = dma.done %s1290, 16
        $region68: #{tpu_custom_call.1} parent=63 // pred_fallthru
          _
      $region64: #{tpu_custom_call.1} parent=5 // pred_fallthru
        _
    $region6: #{tpu_custom_call.1} parent=1 // loop_footer
      %s24 = sadd.s32 1, %s20
    $region7: #{tpu_custom_call.1} parent=1 // loop_footer_branch
      %19 = sbr.rel target = $region3
    $region8: #{tpu_custom_call.1} parent=1 // loop_exit
      _
    %1294 = vsyncpa [#allocation4], 1
    %s1295 = scalar_lea.sflag [#allocation4], 1
    %1296 = vsyncpa %s1295, 1

</llo_original>
